<compile_context>
chip_gen: v6e
topology: v6e:2x2x1
jax: 0.10.0
libtpu: 0.0.40
codegen_flags: <defaults>
</compile_context>

<pallas_src>
import functools

import jax
import jax.numpy as jnp
from jax.experimental import pallas as pl
from jax.experimental.pallas import tpu as pltpu

BN_EPS = 1e-5


def _dw_bn_relu_kernel(x_ref, w_ref, shift_ref, o_ref, *, H, W, C):
    # x_ref:     (1, H, W*C)  lane-dense activations for one batch element
    # w_ref:     (9, W*C)     depthwise taps (BN scale folded in), tiled W times
    #                         along lanes, W-out-of-bounds taps pre-zeroed
    # shift_ref: (1, W*C)     folded conv-bias + BN shift, tiled W times
    WC = W * C
    x = x_ref[0]                                       # (H, WC) f32
    w = w_ref[...]                                     # (9, WC) f32

    # W-shifted views (lane rolls on the XLU).  Wrapped lanes are killed by the
    # pre-zeroed tiled weights, so no explicit W-boundary mask is needed.
    xw = (
        pltpu.roll(x, shift=C, axis=1),                # dw = -1 : x[h, w-1]
        x,                                             # dw =  0
        pltpu.roll(x, shift=WC - C, axis=1),           # dw = +1 : x[h, w+1]
    )
    row = jax.lax.broadcasted_iota(jnp.int32, (H, WC), 0)

    acc = jnp.zeros((H, WC), jnp.float32)
    for dh in (-1, 0, 1):
        # Partial sum over the three W-taps of kernel row dh, evaluated in the
        # un-shifted H frame:  s[h'] = sum_dw x[h', w+dw] * w[dh, dw]
        s = jnp.zeros((H, WC), jnp.float32)
        for j, dw in enumerate((-1, 0, 1)):
            k = (dh + 1) * 3 + (dw + 1)
            s = s + xw[j] * w[k:k + 1, :]
        if dh == 0:
            acc = acc + s
        else:
            # out[h] += s[h + dh]  -> single sublane roll, zero the wrapped row.
            rolled = pltpu.roll(s, shift=(-dh) % H, axis=0)
            if dh == -1:
                rolled = jnp.where(row >= 1, rolled, 0.0)
            else:
                rolled = jnp.where(row <= H - 2, rolled, 0.0)
            acc = acc + rolled

    # Folded bias/BN shift + ReLU, single full-width store.
    o_ref[0] = jnp.maximum(acc + shift_ref[...], 0.0)


@functools.partial(jax.jit, static_argnames=("H", "W"))
def dw_bn_relu(x_bnc, H, W, w_taps, conv_bias, bn_gamma, bn_beta, bn_mean, bn_var):
    """Forward of DW_bn_relu.  x_bnc: (B, N, C) with N == H * W."""
    B, N, C = x_bnc.shape
    assert N == H * W
    WC = W * C

    # (B, N, C) -> (B, H, W*C): contiguous, pure metadata reshape (no copy).
    x_lane = x_bnc.reshape(B, H, WC)

    # Host-side prep (tiny, fused/constant-folded under jit):
    #   * fold the BN scale into the per-channel depthwise taps,
    #   * tile the 3x3 taps W times along lanes and zero the taps that would
    #     read outside the image in the W direction,
    #   * fold conv bias + BN mean/beta into a single per-channel shift.
    scale = bn_gamma * jax.lax.rsqrt(bn_var + BN_EPS)                 # (C,)
    shift = (conv_bias - bn_mean) * scale + bn_beta                   # (C,)
    w_scaled = w_taps * scale[None, None, :]                          # (3,3,C)
    w_tiled = jnp.tile(w_scaled.reshape(9, C), (1, W))                # (9, W*C)
    w_idx = jnp.arange(W)
    for kw, dw in ((0, -1), (2, 1)):
        valid = ((w_idx + dw >= 0) & (w_idx + dw <= W - 1)).astype(jnp.float32)
        mask = jnp.repeat(valid, C)                                   # (W*C,)
        w_tiled = w_tiled.at[kw::3].multiply(mask[None, :])
    shift_t = jnp.tile(shift, W).reshape(1, WC)

    kernel = functools.partial(_dw_bn_relu_kernel, H=H, W=W, C=C)
    out = pl.pallas_call(
        kernel,
        out_shape=jax.ShapeDtypeStruct((B, H, WC), jnp.float32),
        grid=(B,),
        in_specs=[pl.BlockSpec((1, H, WC), lambda b: (b, 0, 0)),
                  pl.BlockSpec((9, WC), lambda b: (0, 0)),
                  pl.BlockSpec((1, WC), lambda b: (0, 0))],
        out_specs=pl.BlockSpec((1, H, WC), lambda b: (b, 0, 0)),
        compiler_params=pltpu.CompilerParams(
            dimension_semantics=("parallel",)),
    )(x_lane, w_tiled, shift_t)
    return out.reshape(B, N, C)


def dw_bn_relu_ref(x_bnc, H, W, w_taps, conv_bias, bn_gamma, bn_beta, bn_mean, bn_var):
    """Pure-JAX reference (same math as the PyTorch module, inference BN)."""
    B, N, C = x_bnc.shape
    x_nhwc = x_bnc.reshape(B, H, W, C)
    y = jax.lax.conv_general_dilated(
        x_nhwc, w_taps.reshape(3, 3, 1, C),
        window_strides=(1, 1), padding=((1, 1), (1, 1)),
        dimension_numbers=("NHWC", "HWIO", "NHWC"),
        feature_group_count=C)
    y = y + conv_bias
    y = (y - bn_mean) * jax.lax.rsqrt(bn_var + BN_EPS) * bn_gamma + bn_beta
    y = jnp.maximum(y, 0.0)
    return y.reshape(B, N, C)


if __name__ == "__main__":
    B, C, H, W = 2, 32, 16, 16
    N = H * W

    key = jax.random.PRNGKey(0)
    kx, kw, kb, kg, kbt, km, kv = jax.random.split(key, 7)
    x = jax.random.normal(kx, (B, N, C), jnp.float32)
    w_taps = jax.random.normal(kw, (3, 3, C), jnp.float32) * (2.0 / 9.0) ** 0.5
    conv_bias = 0.1 * jax.random.normal(kb, (C,), jnp.float32)
    bn_gamma = 1.0 + 0.1 * jax.random.normal(kg, (C,), jnp.float32)
    bn_beta = 0.1 * jax.random.normal(kbt, (C,), jnp.float32)
    bn_mean = 0.1 * jax.random.normal(km, (C,), jnp.float32)
    bn_var = jax.random.uniform(kv, (C,), jnp.float32, minval=0.5, maxval=1.5)

    out = dw_bn_relu(x, H, W, w_taps, conv_bias, bn_gamma, bn_beta, bn_mean, bn_var)
    jax.block_until_ready(out)

    ref = dw_bn_relu_ref(x, H, W, w_taps, conv_bias, bn_gamma, bn_beta, bn_mean, bn_var)
    assert out.shape == (B, N, C) and out.dtype == jnp.float32
    assert bool(jnp.all(jnp.isfinite(out)))
    assert bool(jnp.allclose(out, ref, atol=1e-4, rtol=1e-4))
    print("KERNEL_OK")
</pallas_src>

<mosaic_0001>
module attributes {stable_mosaic.version = 11 : i64} {
  func.func @_dw_bn_relu_kernel(%arg0: i32, %arg1: memref<1x16x512xf32, #tpu.memory_space<vmem>>, %arg2: memref<9x512xf32, #tpu.memory_space<vmem>>, %arg3: memref<1x512xf32, #tpu.memory_space<vmem>>, %arg4: memref<1x16x512xf32, #tpu.memory_space<vmem>>) attributes {dimension_semantics = [#tpu.dimension_semantics<parallel>], iteration_bounds = array<i64: 2>, scalar_prefetch = 0 : i64, scratch_operands = 0 : i64, tpu.core_type = #tpu.core_type<tc>, window_params = [{transform_indices = @transform_0, window_bounds = array<i64: 1, 16, 512>}, {pipeline_mode = #tpu.pipeline_mode<synchronous>, transform_indices = @transform_1, window_bounds = array<i64: 9, 512>}, {pipeline_mode = #tpu.pipeline_mode<synchronous>, transform_indices = @transform_2, window_bounds = array<i64: 1, 512>}, {transform_indices = @transform_3, window_bounds = array<i64: 1, 16, 512>}]} {
    %c0 = arith.constant 0 : index
    %c0_0 = arith.constant 0 : index
    %c0_1 = arith.constant 0 : index
    %0 = vector.load %arg1[%c0, %c0_0, %c0_1] : memref<1x16x512xf32, #tpu.memory_space<vmem>>, vector<1x16x512xf32>
    %1 = vector.shape_cast %0 : vector<1x16x512xf32> to vector<16x512xf32>
    %c0_2 = arith.constant 0 : index
    %c0_3 = arith.constant 0 : index
    %2 = vector.load %arg2[%c0_2, %c0_3] : memref<9x512xf32, #tpu.memory_space<vmem>>, vector<9x512xf32>
    %c32_i32 = arith.constant 32 : i32
    %3 = tpu.dynamic_rotate %1 by %c32_i32 dim 1 : vector<16x512xf32>, i32 -> vector<16x512xf32>
    %c480_i32 = arith.constant 480 : i32
    %4 = tpu.dynamic_rotate %1 by %c480_i32 dim 1 : vector<16x512xf32>, i32 -> vector<16x512xf32>
    %5 = tpu.iota {dimensions = array<i32: 0>} : vector<16x512xi32>
    %cst = arith.constant 0.000000e+00 : f32
    %6 = vector.broadcast %cst : f32 to vector<16x512xf32>
    %cst_4 = arith.constant 0.000000e+00 : f32
    %7 = vector.broadcast %cst_4 : f32 to vector<16x512xf32>
    %8 = vector.extract_strided_slice %2 {offsets = [0, 0], sizes = [1, 512], strides = [1, 1]} : vector<9x512xf32> to vector<1x512xf32>
    %9 = vector.broadcast %8 : vector<1x512xf32> to vector<16x512xf32>
    %10 = arith.mulf %3, %9 : vector<16x512xf32>
    %11 = arith.addf %7, %10 : vector<16x512xf32>
    %12 = vector.extract_strided_slice %2 {offsets = [1, 0], sizes = [1, 512], strides = [1, 1]} : vector<9x512xf32> to vector<1x512xf32>
    %13 = vector.broadcast %12 : vector<1x512xf32> to vector<16x512xf32>
    %14 = arith.mulf %1, %13 : vector<16x512xf32>
    %15 = arith.addf %11, %14 : vector<16x512xf32>
    %16 = vector.extract_strided_slice %2 {offsets = [2, 0], sizes = [1, 512], strides = [1, 1]} : vector<9x512xf32> to vector<1x512xf32>
    %17 = vector.broadcast %16 : vector<1x512xf32> to vector<16x512xf32>
    %18 = arith.mulf %4, %17 : vector<16x512xf32>
    %19 = arith.addf %15, %18 : vector<16x512xf32>
    %c1_i32 = arith.constant 1 : i32
    %20 = tpu.dynamic_rotate %19 by %c1_i32 dim 0 : vector<16x512xf32>, i32 -> vector<16x512xf32>
    %c1_i32_5 = arith.constant 1 : i32
    %21 = vector.broadcast %c1_i32_5 : i32 to vector<16x512xi32>
    %22 = arith.cmpi sge, %5, %21 : vector<16x512xi32>
    %cst_6 = arith.constant 0.000000e+00 : f32
    %23 = vector.broadcast %cst_6 : f32 to vector<16x512xf32>
    %24 = arith.select %22, %20, %23 : vector<16x512xi1>, vector<16x512xf32>
    %25 = arith.addf %6, %24 : vector<16x512xf32>
    %cst_7 = arith.constant 0.000000e+00 : f32
    %26 = vector.broadcast %cst_7 : f32 to vector<16x512xf32>
    %27 = vector.extract_strided_slice %2 {offsets = [3, 0], sizes = [1, 512], strides = [1, 1]} : vector<9x512xf32> to vector<1x512xf32>
    %28 = vector.broadcast %27 : vector<1x512xf32> to vector<16x512xf32>
    %29 = arith.mulf %3, %28 : vector<16x512xf32>
    %30 = arith.addf %26, %29 : vector<16x512xf32>
    %31 = vector.extract_strided_slice %2 {offsets = [4, 0], sizes = [1, 512], strides = [1, 1]} : vector<9x512xf32> to vector<1x512xf32>
    %32 = vector.broadcast %31 : vector<1x512xf32> to vector<16x512xf32>
    %33 = arith.mulf %1, %32 : vector<16x512xf32>
    %34 = arith.addf %30, %33 : vector<16x512xf32>
    %35 = vector.extract_strided_slice %2 {offsets = [5, 0], sizes = [1, 512], strides = [1, 1]} : vector<9x512xf32> to vector<1x512xf32>
    %36 = vector.broadcast %35 : vector<1x512xf32> to vector<16x512xf32>
    %37 = arith.mulf %4, %36 : vector<16x512xf32>
    %38 = arith.addf %34, %37 : vector<16x512xf32>
    %39 = arith.addf %25, %38 : vector<16x512xf32>
    %cst_8 = arith.constant 0.000000e+00 : f32
    %40 = vector.broadcast %cst_8 : f32 to vector<16x512xf32>
    %41 = vector.extract_strided_slice %2 {offsets = [6, 0], sizes = [1, 512], strides = [1, 1]} : vector<9x512xf32> to vector<1x512xf32>
    %42 = vector.broadcast %41 : vector<1x512xf32> to vector<16x512xf32>
    %43 = arith.mulf %3, %42 : vector<16x512xf32>
    %44 = arith.addf %40, %43 : vector<16x512xf32>
    %45 = vector.extract_strided_slice %2 {offsets = [7, 0], sizes = [1, 512], strides = [1, 1]} : vector<9x512xf32> to vector<1x512xf32>
    %46 = vector.broadcast %45 : vector<1x512xf32> to vector<16x512xf32>
    %47 = arith.mulf %1, %46 : vector<16x512xf32>
    %48 = arith.addf %44, %47 : vector<16x512xf32>
    %49 = vector.extract_strided_slice %2 {offsets = [8, 0], sizes = [1, 512], strides = [1, 1]} : vector<9x512xf32> to vector<1x512xf32>
    %50 = vector.broadcast %49 : vector<1x512xf32> to vector<16x512xf32>
    %51 = arith.mulf %4, %50 : vector<16x512xf32>
    %52 = arith.addf %48, %51 : vector<16x512xf32>
    %c15_i32 = arith.constant 15 : i32
    %53 = tpu.dynamic_rotate %52 by %c15_i32 dim 0 : vector<16x512xf32>, i32 -> vector<16x512xf32>
    %c14_i32 = arith.constant 14 : i32
    %54 = vector.broadcast %c14_i32 : i32 to vector<16x512xi32>
    %55 = arith.cmpi sle, %5, %54 : vector<16x512xi32>
    %cst_9 = arith.constant 0.000000e+00 : f32
    %56 = vector.broadcast %cst_9 : f32 to vector<16x512xf32>
    %57 = arith.select %55, %53, %56 : vector<16x512xi1>, vector<16x512xf32>
    %58 = arith.addf %39, %57 : vector<16x512xf32>
    %c0_10 = arith.constant 0 : index
    %c0_11 = arith.constant 0 : index
    %59 = vector.load %arg3[%c0_10, %c0_11] : memref<1x512xf32, #tpu.memory_space<vmem>>, vector<1x512xf32>
    %60 = vector.broadcast %59 : vector<1x512xf32> to vector<16x512xf32>
    %61 = arith.addf %58, %60 : vector<16x512xf32>
    %cst_12 = arith.constant 0.000000e+00 : f32
    %62 = vector.broadcast %cst_12 : f32 to vector<16x512xf32>
    %63 = arith.maximumf %61, %62 : vector<16x512xf32>
    %c0_13 = arith.constant 0 : index
    %c0_14 = arith.constant 0 : index
    %c0_15 = arith.constant 0 : index
    %64 = vector.load %arg4[%c0_13, %c0_14, %c0_15] : memref<1x16x512xf32, #tpu.memory_space<vmem>>, vector<1x16x512xf32>
    %65 = vector.shape_cast %64 : vector<1x16x512xf32> to vector<16x512xf32>
    %66 = vector.shape_cast %63 : vector<16x512xf32> to vector<1x16x512xf32>
    tpu.vector_store %arg4[%c0_13, %c0_14, %c0_15], %66 {strides = array<i32>} : memref<1x16x512xf32, #tpu.memory_space<vmem>>, vector<1x16x512xf32>,
    return
  }
  func.func @transform_0(%arg0: i32) -> (i32, i32, i32) {
    %c0_i32 = arith.constant 0 : i32
    %c0_i32_0 = arith.constant 0 : i32
    %c0_i32_1 = arith.constant 0 : i32
    return %arg0, %c0_i32, %c0_i32_0 : i32, i32, i32
  }
  func.func @transform_1(%arg0: i32) -> (i32, i32) {
    %c0_i32 = arith.constant 0 : i32
    %c0_i32_0 = arith.constant 0 : i32
    %c0_i32_1 = arith.constant 0 : i32
    return %c0_i32, %c0_i32_0 : i32, i32
  }
  func.func @transform_2(%arg0: i32) -> (i32, i32) {
    %c0_i32 = arith.constant 0 : i32
    %c0_i32_0 = arith.constant 0 : i32
    %c0_i32_1 = arith.constant 0 : i32
    return %c0_i32, %c0_i32_0 : i32, i32
  }
  func.func @transform_3(%arg0: i32) -> (i32, i32, i32) {
    %c0_i32 = arith.constant 0 : i32
    %c0_i32_0 = arith.constant 0 : i32
    %c0_i32_1 = arith.constant 0 : i32
    return %arg0, %c0_i32, %c0_i32_0 : i32, i32, i32
  }
}

</mosaic_0001>

<llo_original>
// kernel: tile.12
$region0: #{tile.12}
  %s0 = inlined_call_operand.vmem [shape: f32[9,16,32], index: 0, kind: input, shape index: {}]
  %s1 = inlined_call_operand.vmem [shape: f32[9,512], index: 1, kind: output, shape index: {}]
  %v2 = vld [vmem:[%s0] ss:$4 sm:$0xff]
  %vm3 = vcmask 261120
  %4 = vst.msk [vmem:[%s1] ss:$8 sm:$0xf] %vm3, %v2
  %s5 = scalar_lea.vmem %s1, 4294967265
  %6 = vst.msk [vmem:[%s5] ss:$8 sm:$0xf0] %vm3, %v2
  %s7 = scalar_lea.vmem %s0, 32
  %v8 = vld [vmem:[%s7] ss:$4 sm:$0xff]
  %vm9 = vcmask 261120
  %s10 = scalar_lea.vmem %s1, 2
  %11 = vst.msk [vmem:[%s10] ss:$8 sm:$0xf] %vm9, %v8
  %s12 = scalar_lea.vmem %s1, 4294967267
  %13 = vst.msk [vmem:[%s12] ss:$8 sm:$0xf0] %vm9, %v8
  %s14 = scalar_lea.vmem %s0, 64
  %v15 = vld [vmem:[%s14] ss:$4 sm:$0xff]
  %vm16 = vcmask 261120
  %s17 = scalar_lea.vmem %s1, 4
  %18 = vst.msk [vmem:[%s17] ss:$8 sm:$0xf] %vm16, %v15
  %s19 = scalar_lea.vmem %s1, 4294967269
  %20 = vst.msk [vmem:[%s19] ss:$8 sm:$0xf0] %vm16, %v15
  %s21 = scalar_lea.vmem %s0, 96
  %v22 = vld [vmem:[%s21] ss:$4 sm:$0xff]
  %vm23 = vcmask 261120
  %s24 = scalar_lea.vmem %s1, 6
  %25 = vst.msk [vmem:[%s24] ss:$8 sm:$0xf] %vm23, %v22
  %s26 = scalar_lea.vmem %s1, 4294967271
  %27 = vst.msk [vmem:[%s26] ss:$8 sm:$0xf0] %vm23, %v22
  %s28 = scalar_lea.vmem %s0, 128
  %v29 = vld [vmem:[%s28] ss:$4 sm:$0xf]
  %vm30 = vcmask 261120
  %s31 = scalar_lea.vmem %s1, 32
  %32 = vst.msk [vmem:[%s31] ss:$8 sm:$0xf] %vm30, %v29
  %s33 = scalar_lea.vmem %s0, 3
  %s34 = smov 3
  %v35 = vld [vmem:[%s33] ss:$16 sm:%s34]
  %s36 = scalar_lea.vmem %s0, 3
  %s37 = smov 12
  %v38 = vld [vmem:[%s36] ss:$16 sm:%s37]
  %vm39 = vcmask 1043458
  %v40 = vsel %vm39, %v38, %v35
  %s41 = scalar_lea.vmem %s0, 3
  %s42 = smov 48
  %v43 = vld [vmem:[%s41] ss:$16 sm:%s42]
  %vm44 = vcmask 1045508
  %v45 = vsel %vm44, %v43, %v40
  %s46 = scalar_lea.vmem %s0, 3
  %s47 = smov 192
  %v48 = vld [vmem:[%s46] ss:$16 sm:%s47]
  %vm49 = vcmask 1047558
  %v50 = vsel %vm49, %v48, %v45
  %51 = vrot.lane.b32.xlu0 %v50, 96
  %v52 = vpop.permute.xlu0 %51
  %vm53 = vcmask 1048320
  %54 = vst.msk [vmem:[%s1] sm:$0xff] %vm53, %v52
  %s55 = scalar_lea.vmem %s0, 131
  %s56 = smov 3
  %v57 = vld [vmem:[%s55] ss:$-124 sm:%s56]
  %s58 = scalar_lea.vmem %s0, 4294967287
  %s59 = smov 12
  %v60 = vld [vmem:[%s58] ss:$16 sm:%s59]
  %vm61 = vcmask 1043458
  %v62 = vsel %vm61, %v60, %v57
  %s63 = scalar_lea.vmem %s0, 4294967287
  %s64 = smov 48
  %v65 = vld [vmem:[%s63] ss:$16 sm:%s64]
  %vm66 = vcmask 1045508
  %v67 = vsel %vm66, %v65, %v62
  %s68 = scalar_lea.vmem %s0, 4294967287
  %s69 = smov 192
  %v70 = vld [vmem:[%s68] ss:$16 sm:%s69]
  %vm71 = vcmask 1047558
  %v72 = vsel %vm71, %v70, %v67
  %73 = vrot.lane.b32.xlu0 %v72, 96
  %v74 = vpop.permute.xlu0 %73
  %vm75 = vcmask 1048320
  %s76 = scalar_lea.vmem %s1, 32
  %77 = vst.msk [vmem:[%s76] ss:$-24 sm:$0x3] %vm75, %v74
  %s78 = scalar_lea.vmem %s1, 7
  %79 = vst.msk [vmem:[%s78] sm:$0xfc] %vm75, %v74
  %s80 = scalar_lea.vmem %s0, 135
  %s81 = smov 3
  %v82 = vld [vmem:[%s80] ss:$-16 sm:%s81]
  %s83 = scalar_lea.vmem %s0, 4294967275
  %s84 = smov 12
  %v85 = vld [vmem:[%s83] ss:$16 sm:%s84]
  %vm86 = vcmask 1043458
  %v87 = vsel %vm86, %v85, %v82
  %s88 = scalar_lea.vmem %s0, 4294967275
  %s89 = smov 48
  %v90 = vld [vmem:[%s88] ss:$16 sm:%s89]
  %vm91 = vcmask 1045508
  %v92 = vsel %vm91, %v90, %v87
  %s93 = scalar_lea.vmem %s0, 4294967275
  %s94 = smov 192
  %v95 = vld [vmem:[%s93] ss:$16 sm:%s94]
  %vm96 = vcmask 1047558
  %v97 = vsel %vm96, %v95, %v92
  %98 = vrot.lane.b32.xlu0 %v97, 96
  %v99 = vpop.permute.xlu0 %98
  %vm100 = vcmask 1048320
  %s101 = scalar_lea.vmem %s1, 40
  %102 = vst.msk [vmem:[%s101] ss:$-25 sm:$0x3] %vm100, %v99
  %s103 = scalar_lea.vmem %s1, 14
  %104 = vst.msk [vmem:[%s103] sm:$0xfc] %vm100, %v99
  %s105 = scalar_lea.vmem %s0, 139
  %v106 = vld [vmem:[%s105] sm:$0x1]
  %s107 = scalar_lea.vmem %s0, 91
  %s108 = smov 6
  %v109 = vld [vmem:[%s107] ss:$16 sm:%s108]
  %vm110 = vcmask 1042433
  %v111 = vsel %vm110, %v109, %v106
  %s112 = scalar_lea.vmem %s0, 4294967263
  %s113 = smov 24
  %v114 = vld [vmem:[%s112] ss:$16 sm:%s113]
  %vm115 = vcmask 1044483
  %v116 = vsel %vm115, %v114, %v111
  %s117 = scalar_lea.vmem %s0, 4294967263
  %s118 = smov 96
  %v119 = vld [vmem:[%s117] ss:$16 sm:%s118]
  %vm120 = vcmask 1046533
  %v121 = vsel %vm120, %v119, %v116
  %s122 = scalar_lea.vmem %s0, 72
  %v123 = vld [vmem:[%s122] sm:$0x80]
  %vm124 = vcmask 1047559
  %v125 = vsel %vm124, %v123, %v121
  %126 = vrot.lane.b32.xlu0 %v125, 96
  %v127 = vpop.permute.xlu0 %126
  %vm128 = vcmask 1048320
  %s129 = scalar_lea.vmem %s1, 48
  %130 = vst.msk [vmem:[%s129] ss:$-26 sm:$0x3] %vm128, %v127
  %s131 = scalar_lea.vmem %s1, 21
  %132 = vst.msk [vmem:[%s131] sm:$0xfc] %vm128, %v127
  %s133 = scalar_lea.vmem %s0, 143
  %s134 = smov 3
  %v135 = vld [vmem:[%s133] ss:$-48 sm:%s134]
  %s136 = scalar_lea.vmem %s0, 79
  %s137 = smov 12
  %v138 = vld [vmem:[%s136] ss:$16 sm:%s137]
  %vm139 = vcmask 1043458
  %v140 = vsel %vm139, %v138, %v135
  %141 = vrot.lane.b32.xlu0 %v140, 96
  %v142 = vpop.permute.xlu0 %141
  %vm143 = vcmask 1048320
  %s144 = scalar_lea.vmem %s1, 56
  %145 = vst.msk [vmem:[%s144] ss:$-27 sm:$0x3] %vm143, %v142
  %s146 = scalar_lea.vmem %s1, 28
  %147 = vst.msk [vmem:[%s146] sm:$0xc] %vm143, %v142
  %s148 = scalar_lea.vmem %s0, 2
  %s149 = smov 3
  %v150 = vld [vmem:[%s148] ss:$16 sm:%s149]
  %s151 = scalar_lea.vmem %s0, 2
  %s152 = smov 12
  %v153 = vld [vmem:[%s151] ss:$16 sm:%s152]
  %vm154 = vcmask 1043458
  %v155 = vsel %vm154, %v153, %v150
  %s156 = scalar_lea.vmem %s0, 2
  %s157 = smov 48
  %v158 = vld [vmem:[%s156] ss:$16 sm:%s157]
  %vm159 = vcmask 1045508
  %v160 = vsel %vm159, %v158, %v155
  %s161 = scalar_lea.vmem %s0, 2
  %s162 = smov 192
  %v163 = vld [vmem:[%s161] ss:$16 sm:%s162]
  %vm164 = vcmask 1047558
  %v165 = vsel %vm164, %v163, %v160
  %166 = vrot.lane.b32.xlu0 %v165, 64
  %v167 = vpop.permute.xlu0 %166
  %vm168 = vcmask 785920
  %169 = vst.msk [vmem:[%s1] sm:$0xff] %vm168, %v167
  %s170 = scalar_lea.vmem %s0, 130
  %s171 = smov 3
  %v172 = vld [vmem:[%s170] ss:$-124 sm:%s171]
  %s173 = scalar_lea.vmem %s0, 4294967286
  %s174 = smov 12
  %v175 = vld [vmem:[%s173] ss:$16 sm:%s174]
  %vm176 = vcmask 1043458
  %v177 = vsel %vm176, %v175, %v172
  %s178 = scalar_lea.vmem %s0, 4294967286
  %s179 = smov 48
  %v180 = vld [vmem:[%s178] ss:$16 sm:%s179]
  %vm181 = vcmask 1045508
  %v182 = vsel %vm181, %v180, %v177
  %s183 = scalar_lea.vmem %s0, 4294967286
  %s184 = smov 192
  %v185 = vld [vmem:[%s183] ss:$16 sm:%s184]
  %vm186 = vcmask 1047558
  %v187 = vsel %vm186, %v185, %v182
  %188 = vrot.lane.b32.xlu0 %v187, 64
  %v189 = vpop.permute.xlu0 %188
  %vm190 = vcmask 785920
  %s191 = scalar_lea.vmem %s1, 32
  %192 = vst.msk [vmem:[%s191] ss:$-24 sm:$0x3] %vm190, %v189
  %s193 = scalar_lea.vmem %s1, 7
  %194 = vst.msk [vmem:[%s193] sm:$0xfc] %vm190, %v189
  %s195 = scalar_lea.vmem %s0, 134
  %s196 = smov 3
  %v197 = vld [vmem:[%s195] ss:$-16 sm:%s196]
  %s198 = scalar_lea.vmem %s0, 4294967274
  %s199 = smov 12
  %v200 = vld [vmem:[%s198] ss:$16 sm:%s199]
  %vm201 = vcmask 1043458
  %v202 = vsel %vm201, %v200, %v197
  %s203 = scalar_lea.vmem %s0, 4294967274
  %s204 = smov 48
  %v205 = vld [vmem:[%s203] ss:$16 sm:%s204]
  %vm206 = vcmask 1045508
  %v207 = vsel %vm206, %v205, %v202
  %s208 = scalar_lea.vmem %s0, 4294967274
  %s209 = smov 192
  %v210 = vld [vmem:[%s208] ss:$16 sm:%s209]
  %vm211 = vcmask 1047558
  %v212 = vsel %vm211, %v210, %v207
  %213 = vrot.lane.b32.xlu0 %v212, 64
  %v214 = vpop.permute.xlu0 %213
  %vm215 = vcmask 785920
  %s216 = scalar_lea.vmem %s1, 40
  %217 = vst.msk [vmem:[%s216] ss:$-25 sm:$0x3] %vm215, %v214
  %s218 = scalar_lea.vmem %s1, 14
  %219 = vst.msk [vmem:[%s218] sm:$0xfc] %vm215, %v214
  %s220 = scalar_lea.vmem %s0, 138
  %v221 = vld [vmem:[%s220] sm:$0x1]
  %s222 = scalar_lea.vmem %s0, 90
  %s223 = smov 6
  %v224 = vld [vmem:[%s222] ss:$16 sm:%s223]
  %vm225 = vcmask 1042433
  %v226 = vsel %vm225, %v224, %v221
  %s227 = scalar_lea.vmem %s0, 4294967262
  %s228 = smov 24
  %v229 = vld [vmem:[%s227] ss:$16 sm:%s228]
  %vm230 = vcmask 1044483
  %v231 = vsel %vm230, %v229, %v226
  %s232 = scalar_lea.vmem %s0, 4294967262
  %s233 = smov 96
  %v234 = vld [vmem:[%s232] ss:$16 sm:%s233]
  %vm235 = vcmask 1046533
  %v236 = vsel %vm235, %v234, %v231
  %s237 = scalar_lea.vmem %s0, 71
  %v238 = vld [vmem:[%s237] sm:$0x80]
  %vm239 = vcmask 1047559
  %v240 = vsel %vm239, %v238, %v236
  %241 = vrot.lane.b32.xlu0 %v240, 64
  %v242 = vpop.permute.xlu0 %241
  %vm243 = vcmask 785920
  %s244 = scalar_lea.vmem %s1, 48
  %245 = vst.msk [vmem:[%s244] ss:$-26 sm:$0x3] %vm243, %v242
  %s246 = scalar_lea.vmem %s1, 21
  %247 = vst.msk [vmem:[%s246] sm:$0xfc] %vm243, %v242
  %s248 = scalar_lea.vmem %s0, 142
  %s249 = smov 3
  %v250 = vld [vmem:[%s248] ss:$-48 sm:%s249]
  %s251 = scalar_lea.vmem %s0, 78
  %s252 = smov 12
  %v253 = vld [vmem:[%s251] ss:$16 sm:%s252]
  %vm254 = vcmask 1043458
  %v255 = vsel %vm254, %v253, %v250
  %256 = vrot.lane.b32.xlu0 %v255, 64
  %v257 = vpop.permute.xlu0 %256
  %vm258 = vcmask 785920
  %s259 = scalar_lea.vmem %s1, 56
  %260 = vst.msk [vmem:[%s259] ss:$-27 sm:$0x3] %vm258, %v257
  %s261 = scalar_lea.vmem %s1, 28
  %262 = vst.msk [vmem:[%s261] sm:$0xc] %vm258, %v257
  %s263 = scalar_lea.vmem %s0, 1
  %s264 = smov 3
  %v265 = vld [vmem:[%s263] ss:$16 sm:%s264]
  %s266 = scalar_lea.vmem %s0, 1
  %s267 = smov 12
  %v268 = vld [vmem:[%s266] ss:$16 sm:%s267]
  %vm269 = vcmask 1043458
  %v270 = vsel %vm269, %v268, %v265
  %s271 = scalar_lea.vmem %s0, 1
  %s272 = smov 48
  %v273 = vld [vmem:[%s271] ss:$16 sm:%s272]
  %vm274 = vcmask 1045508
  %v275 = vsel %vm274, %v273, %v270
  %s276 = scalar_lea.vmem %s0, 1
  %s277 = smov 192
  %v278 = vld [vmem:[%s276] ss:$16 sm:%s277]
  %vm279 = vcmask 1047558
  %v280 = vsel %vm279, %v278, %v275
  %281 = vrot.lane.b32.xlu0 %v280, 32
  %v282 = vpop.permute.xlu0 %281
  %vm283 = vcmask 523520
  %284 = vst.msk [vmem:[%s1] sm:$0xff] %vm283, %v282
  %s285 = scalar_lea.vmem %s0, 129
  %s286 = smov 3
  %v287 = vld [vmem:[%s285] ss:$-124 sm:%s286]
  %s288 = scalar_lea.vmem %s0, 4294967285
  %s289 = smov 12
  %v290 = vld [vmem:[%s288] ss:$16 sm:%s289]
  %vm291 = vcmask 1043458
  %v292 = vsel %vm291, %v290, %v287
  %s293 = scalar_lea.vmem %s0, 4294967285
  %s294 = smov 48
  %v295 = vld [vmem:[%s293] ss:$16 sm:%s294]
  %vm296 = vcmask 1045508
  %v297 = vsel %vm296, %v295, %v292
  %s298 = scalar_lea.vmem %s0, 4294967285
  %s299 = smov 192
  %v300 = vld [vmem:[%s298] ss:$16 sm:%s299]
  %vm301 = vcmask 1047558
  %v302 = vsel %vm301, %v300, %v297
  %303 = vrot.lane.b32.xlu0 %v302, 32
  %v304 = vpop.permute.xlu0 %303
  %vm305 = vcmask 523520
  %s306 = scalar_lea.vmem %s1, 32
  %307 = vst.msk [vmem:[%s306] ss:$-24 sm:$0x3] %vm305, %v304
  %s308 = scalar_lea.vmem %s1, 7
  %309 = vst.msk [vmem:[%s308] sm:$0xfc] %vm305, %v304
  %s310 = scalar_lea.vmem %s0, 133
  %s311 = smov 3
  %v312 = vld [vmem:[%s310] ss:$-16 sm:%s311]
  %s313 = scalar_lea.vmem %s0, 4294967273
  %s314 = smov 12
  %v315 = vld [vmem:[%s313] ss:$16 sm:%s314]
  %vm316 = vcmask 1043458
  %v317 = vsel %vm316, %v315, %v312
  %s318 = scalar_lea.vmem %s0, 4294967273
  %s319 = smov 48
  %v320 = vld [vmem:[%s318] ss:$16 sm:%s319]
  %vm321 = vcmask 1045508
  %v322 = vsel %vm321, %v320, %v317
  %s323 = scalar_lea.vmem %s0, 4294967273
  %s324 = smov 192
  %v325 = vld [vmem:[%s323] ss:$16 sm:%s324]
  %vm326 = vcmask 1047558
  %v327 = vsel %vm326, %v325, %v322
  %328 = vrot.lane.b32.xlu0 %v327, 32
  %v329 = vpop.permute.xlu0 %328
  %vm330 = vcmask 523520
  %s331 = scalar_lea.vmem %s1, 40
  %332 = vst.msk [vmem:[%s331] ss:$-25 sm:$0x3] %vm330, %v329
  %s333 = scalar_lea.vmem %s1, 14
  %334 = vst.msk [vmem:[%s333] sm:$0xfc] %vm330, %v329
  %s335 = scalar_lea.vmem %s0, 137
  %v336 = vld [vmem:[%s335] sm:$0x1]
  %s337 = scalar_lea.vmem %s0, 89
  %s338 = smov 6
  %v339 = vld [vmem:[%s337] ss:$16 sm:%s338]
  %vm340 = vcmask 1042433
  %v341 = vsel %vm340, %v339, %v336
  %s342 = scalar_lea.vmem %s0, 4294967261
  %s343 = smov 24
  %v344 = vld [vmem:[%s342] ss:$16 sm:%s343]
  %vm345 = vcmask 1044483
  %v346 = vsel %vm345, %v344, %v341
  %s347 = scalar_lea.vmem %s0, 4294967261
  %s348 = smov 96
  %v349 = vld [vmem:[%s347] ss:$16 sm:%s348]
  %vm350 = vcmask 1046533
  %v351 = vsel %vm350, %v349, %v346
  %s352 = scalar_lea.vmem %s0, 70
  %v353 = vld [vmem:[%s352] sm:$0x80]
  %vm354 = vcmask 1047559
  %v355 = vsel %vm354, %v353, %v351
  %356 = vrot.lane.b32.xlu0 %v355, 32
  %v357 = vpop.permute.xlu0 %356
  %vm358 = vcmask 523520
  %s359 = scalar_lea.vmem %s1, 48
  %360 = vst.msk [vmem:[%s359] ss:$-26 sm:$0x3] %vm358, %v357
  %s361 = scalar_lea.vmem %s1, 21
  %362 = vst.msk [vmem:[%s361] sm:$0xfc] %vm358, %v357
  %s363 = scalar_lea.vmem %s0, 141
  %s364 = smov 3
  %v365 = vld [vmem:[%s363] ss:$-48 sm:%s364]
  %s366 = scalar_lea.vmem %s0, 77
  %s367 = smov 12
  %v368 = vld [vmem:[%s366] ss:$16 sm:%s367]
  %vm369 = vcmask 1043458
  %v370 = vsel %vm369, %v368, %v365
  %371 = vrot.lane.b32.xlu0 %v370, 32
  %v372 = vpop.permute.xlu0 %371
  %vm373 = vcmask 523520
  %s374 = scalar_lea.vmem %s1, 56
  %375 = vst.msk [vmem:[%s374] ss:$-27 sm:$0x3] %vm373, %v372
  %s376 = scalar_lea.vmem %s1, 28
  %377 = vst.msk [vmem:[%s376] sm:$0xc] %vm373, %v372

// kernel: tile.16
$region0: #{tile.16}
  #allocation0 [shape = 's32[1]{0}', space=sflag, size = 0x4, scoped, tag = 'scoped memory for tile.16']
  %s0 = inlined_call_operand.vmem [shape: f32[32], index: 0, kind: input, shape index: {}]
  %s1 = inlined_call_operand.vmem [shape: f32[16,32], index: 1, kind: output, shape index: {}]
  // Predicated region
  $region2: #{tile.16} parent=0 // pred_check
    _
  $region3: #{tile.16} parent=0 // pred_check_branch
    %3 = sbr.rel (0) target = $region5
  $region4: #{tile.16} parent=0 // pred_region
    _
  $region5: #{tile.16} parent=0 // pred_fallthru
    _
  %v4 = vld [vmem:[%s0] ss:$0 sm:$0xff]
  %5 = vst [vmem:[%s1] sm:$0xff] %v4
  %s6 = scalar_lea.vmem %s1, 8
  %7 = vst [vmem:[%s6] sm:$0xff] %v4

// kernel: tile.17
$region0: #{tile.17}
  %s0 = inlined_call_operand.vmem [shape: f32[16,32], index: 0, kind: input, shape index: {}]
  %s1 = inlined_call_operand.vmem [shape: f32[1,512], index: 1, kind: output, shape index: {}]
  $region1: #{tile.17} parent=0
    #allocation0 [shape = 'u8[16384]{0}', space=vmem, size = 0x4000, scoped, tag = 'scoped mem for output reshape']
    %v2 = vld [vmem:[%s0] ss:$4 sm:$0xf]
    %vm3 = vcmask 261120
    %4 = vst.msk [vmem:[#allocation0] ss:$8 sm:$0xf] %vm3, %v2
    %s5 = scalar_lea.vmem %s0, 3
    %v6 = vld [vmem:[%s5] ss:$4 sm:$0xf]
    %7 = vrot.lane.b32.xlu0 %v6, 96
    %v8 = vpop.permute.xlu0 %7
    %vm9 = vcmask 1048320
    %10 = vst.msk [vmem:[#allocation0] ss:$8 sm:$0xf] %vm9, %v8
    %s11 = scalar_lea.vmem %s0, 2
    %v12 = vld [vmem:[%s11] ss:$4 sm:$0xf]
    %13 = vrot.lane.b32.xlu0 %v12, 64
    %v14 = vpop.permute.xlu0 %13
    %vm15 = vcmask 785920
    %16 = vst.msk [vmem:[#allocation0] ss:$8 sm:$0xf] %vm15, %v14
    %s17 = scalar_lea.vmem %s0, 1
    %v18 = vld [vmem:[%s17] ss:$4 sm:$0xf]
    %19 = vrot.lane.b32.xlu0 %v18, 32
    %v20 = vpop.permute.xlu0 %19
    %vm21 = vcmask 523520
    %22 = vst.msk [vmem:[#allocation0] ss:$8 sm:$0xf] %vm21, %v20
    %s24 = sshll.u32 1, 1
    %s25 = ssub.s32 %s24, 1
    %v27 = vld [vmem:[#allocation0] sm:%s25]
    %s28 = sshll.u32 1, 1
    %s29 = ssub.s32 %s28, 1
    %30 = vst [vmem:[%s1] sm:%s29] %v27
    %s31 = scalar_lea.vmem [#allocation0], 8
    %v32 = vld [vmem:[%s31] sm:%s25]
    %s33 = sshll.u32 1, 1
    %s34 = ssub.s32 %s33, 1
    %s35 = scalar_lea.vmem %s1, 1
    %36 = vst [vmem:[%s35] sm:%s34] %v32
    %s37 = scalar_lea.vmem [#allocation0], 16
    %v38 = vld [vmem:[%s37] sm:%s25]
    %s39 = sshll.u32 1, 1
    %s40 = ssub.s32 %s39, 1
    %s41 = smul.addr 1, 2
    %s42 = scalar_lea.vmem %s1, %s41
    %43 = vst [vmem:[%s42] sm:%s40] %v38
    %s44 = scalar_lea.vmem [#allocation0], 24
    %v45 = vld [vmem:[%s44] sm:%s25]
    %s46 = sshll.u32 1, 1
    %s47 = ssub.s32 %s46, 1
    %s48 = smul.addr 1, 3
    %s49 = scalar_lea.vmem %s1, %s48
    %50 = vst [vmem:[%s49] sm:%s47] %v45

// kernel: dw_bn_relu.1
$region0: #{dw_bn_relu.1}
  #allocation0 [shape = 'u32[]', space=smem, size = 0x4, offset = 0x4, fixed_abs, tag = 'smem constant byte address 0x4 - core index']
  #allocation1 [shape = 'u32[144,128]{1,0:T(1,128)}', space=vmem, size = 0x12000, scoped, tag = 'internal scratch']
  %s0 = inlined_call_operand.vmem [shape: f32[2,16,512], index: 0, kind: input, shape index: {}]
  %s1 = inlined_call_operand.vmem [shape: f32[9,512], index: 1, kind: input, shape index: {}]
  %s2 = inlined_call_operand.vmem [shape: f32[1,512], index: 2, kind: input, shape index: {}]
  %s3 = inlined_call_operand.vmem [shape: f32[2,16,512], index: 3, kind: output, shape index: {}]
  %s4 = sld [smem:[#allocation0]]
  $region45: #{dw_bn_relu.1} parent=0
    _
  %s6 = ssub.s32 1, %s4
  %s7 = scalar_select 0, %s6, %s4
  loop: start=0, step=1, limit=4
  $region2: #{dw_bn_relu.1} parent=0 // loop_pre_header
    _
  $region3: #{dw_bn_relu.1} parent=0 // loop_header
    %s9 = sphi 0, %s13
    %p10 = scmp.ge.s32.totalorder %s9, 4
    %s19 = sphi 0, %s21
    %s22 = sphi 0, %s19
    %s23 = sphi 0, %s22
    %s39 = sphi 0, %s23
    %s43 = sphi 0, %s43
    %s45 = sphi 0, %s43
    %s46 = sphi 0, %s45
    %s60 = sphi 0, %s46
    %s64 = sphi 0, %s64
    %s66 = sphi 0, %s64
    %s67 = sphi 0, %s66
    %s81 = sphi 0, %s67
    %s87 = sphi 0, %s89
    %s90 = sphi 0, %s87
    %s91 = sphi 0, %s90
    %s107 = sphi 0, %s91
  $region4: #{dw_bn_relu.1} parent=0 // loop_header_branch
    %12 = sbr.rel (%p10) target = $region8
  $region5: #{dw_bn_relu.1} parent=0 // loop_body
    %s14 = ssub.s32 %s9, 1
    %s15 = ssub.s32 %s9, 2
    %s16 = sadd.s32 %s9, 1
    %s17 = ssub.s32 %s9, %s16
    %p18 = scmp.eq.s32.totalorder %s17, 0
    %s20 = sadd.s32 %s19, 1
    %s21 = scalar_select %p18, %s19, %s20
    %p24 = pneg %p18
    %p25 = scmp.eq.s32.totalorder %s9, 1
    %p26 = por %p24, %p25
    %p27 = scmp.ne.s32.totalorder %s19, %s22
    %p28 = scmp.eq.s32.totalorder %s9, 0
    %p29 = por %p27, %p28
    %p30 = scmp.ne.s32.totalorder %s19, %s22
    %p31 = scmp.eq.s32.totalorder %s14, 1
    %p32 = por %p30, %p31
    %p33 = scmp.ne.s32.totalorder %s22, %s23
    %p34 = scmp.eq.s32.totalorder %s14, 0
    %p35 = por %p33, %p34
    %p36 = scmp.ne.s32.totalorder %s22, %s23
    %p37 = scmp.eq.s32.totalorder %s15, 1
    %p38 = por %p36, %p37
    %p40 = scmp.ne.s32.totalorder %s23, %s39
    %p41 = scmp.eq.s32.totalorder %s15, 0
    %p42 = por %p40, %p41
    %s44 = sadd.s32 %s43, 1
    %p47 = scmp.eq.s32.totalorder %s9, 1
    %p48 = scmp.ne.s32.totalorder %s43, %s45
    %p49 = scmp.eq.s32.totalorder %s9, 0
    %p50 = por %p48, %p49
    %p51 = scmp.ne.s32.totalorder %s43, %s45
    %p52 = scmp.eq.s32.totalorder %s14, 1
    %p53 = por %p51, %p52
    %p54 = scmp.ne.s32.totalorder %s45, %s46
    %p55 = scmp.eq.s32.totalorder %s14, 0
    %p56 = por %p54, %p55
    %p57 = scmp.ne.s32.totalorder %s45, %s46
    %p58 = scmp.eq.s32.totalorder %s15, 1
    %p59 = por %p57, %p58
    %p61 = scmp.ne.s32.totalorder %s46, %s60
    %p62 = scmp.eq.s32.totalorder %s15, 0
    %p63 = por %p61, %p62
    %s65 = sadd.s32 %s64, 1
    %p68 = scmp.eq.s32.totalorder %s9, 1
    %p69 = scmp.ne.s32.totalorder %s64, %s66
    %p70 = scmp.eq.s32.totalorder %s9, 0
    %p71 = por %p69, %p70
    %p72 = scmp.ne.s32.totalorder %s64, %s66
    %p73 = scmp.eq.s32.totalorder %s14, 1
    %p74 = por %p72, %p73
    %p75 = scmp.ne.s32.totalorder %s66, %s67
    %p76 = scmp.eq.s32.totalorder %s14, 0
    %p77 = por %p75, %p76
    %p78 = scmp.ne.s32.totalorder %s66, %s67
    %p79 = scmp.eq.s32.totalorder %s15, 1
    %p80 = por %p78, %p79
    %p82 = scmp.ne.s32.totalorder %s67, %s81
    %p83 = scmp.eq.s32.totalorder %s15, 0
    %p84 = por %p82, %p83
    %s85 = ssub.s32 %s9, %s16
    %p86 = scmp.eq.s32.totalorder %s85, 0
    %s88 = sadd.s32 %s87, 1
    %s89 = scalar_select %p86, %s87, %s88
    %p92 = pneg %p86
    %p93 = scmp.eq.s32.totalorder %s9, 1
    %p94 = por %p92, %p93
    %p95 = scmp.ne.s32.totalorder %s87, %s90
    %p96 = scmp.eq.s32.totalorder %s9, 0
    %p97 = por %p95, %p96
    %p98 = scmp.ne.s32.totalorder %s87, %s90
    %p99 = scmp.eq.s32.totalorder %s14, 1
    %p100 = por %p98, %p99
    %p101 = scmp.ne.s32.totalorder %s90, %s91
    %p102 = scmp.eq.s32.totalorder %s14, 0
    %p103 = por %p101, %p102
    %p104 = scmp.ne.s32.totalorder %s90, %s91
    %p105 = scmp.eq.s32.totalorder %s15, 1
    %p106 = por %p104, %p105
    %p108 = scmp.ne.s32.totalorder %s91, %s107
    %p109 = scmp.eq.s32.totalorder %s15, 0
    %p110 = por %p108, %p109
    %p111 = scmp.le.s32.totalorder 1, %s9
    %p112 = scmp.lt.s32.totalorder %s9, 3
    %p113 = pnand %p111, %p112
    %p114 = pneg %p113
    // Predicated region
    $region9: #{dw_bn_relu.1} parent=5 // pred_check
      _
    $region10: #{dw_bn_relu.1} parent=5 // pred_check_branch
      %116 = sbr.rel (%p113) target = $region12
    $region11: #{dw_bn_relu.1} parent=5 // pred_region
      %s117 = ssub.s32 %s9, 1
      // Predicated region
      $region13: #{dw_bn_relu.1} parent=11 // pred_check
        %p118 = pneg %p56
      $region14: #{dw_bn_relu.1} parent=11 // pred_check_branch
        %120 = sbr.rel (%p118) target = $region16
      $region15: #{dw_bn_relu.1} parent=11 // pred_region
        _
      $region16: #{dw_bn_relu.1} parent=11 // pred_fallthru
        _
      // Predicated region
      $region17: #{dw_bn_relu.1} parent=11 // pred_check
        %p121 = pneg %p77
      $region18: #{dw_bn_relu.1} parent=11 // pred_check_branch
        %123 = sbr.rel (%p121) target = $region20
      $region19: #{dw_bn_relu.1} parent=11 // pred_region
        _
      $region20: #{dw_bn_relu.1} parent=11 // pred_fallthru
        _
    $region12: #{dw_bn_relu.1} parent=5 // pred_fallthru
      _
    %p124 = scmp.lt.s32.totalorder %s9, 2
    // Predicated region
    $region21: #{dw_bn_relu.1} parent=5 // pred_check
      %p125 = pneg %p124
    $region22: #{dw_bn_relu.1} parent=5 // pred_check_branch
      %127 = sbr.rel (%p125) target = $region24
    $region23: #{dw_bn_relu.1} parent=5 // pred_region
      // Predicated region
      $region25: #{dw_bn_relu.1} parent=23 // pred_check
        %p128 = pneg %p29
      $region26: #{dw_bn_relu.1} parent=23 // pred_check_branch
        %130 = sbr.rel (%p128) target = $region28
      $region27: #{dw_bn_relu.1} parent=23 // pred_region
        %p131 = scmp.lt.s32.totalorder %s9, 1
        %s132 = scalar_select %p131, %s9, 1
        %s133 = smul.addr %s132, 8
        %s134 = smul.addr %s133, 8
        %s135 = scalar_lea.vmem %s0, %s134
      $region28: #{dw_bn_relu.1} parent=23 // pred_fallthru
        _
    $region24: #{dw_bn_relu.1} parent=5 // pred_fallthru
      _
    %p136 = scmp.le.s32.totalorder 1, %s9
    %p137 = scmp.lt.s32.totalorder %s9, 3
    %p138 = pnand %p136, %p137
    %p139 = pneg %p138
    // Predicated region
    $region29: #{dw_bn_relu.1} parent=5 // pred_check
      _
    $region30: #{dw_bn_relu.1} parent=5 // pred_check_branch
      %141 = sbr.rel (%p138) target = $region32
    $region31: #{dw_bn_relu.1} parent=5 // pred_region
      %s142 = ssub.s32 %s9, 1
      %p143 = scmp.lt.s32.totalorder %s14, 1
      %s144 = scalar_select %p143, %s14, 1
      %s145 = smul.addr %s144, 8
      %s146 = smul.addr %s145, 8
      %s147 = scalar_lea.vmem %s0, %s146
      %p148 = pneg %p35
      %p149 = pneg %p32
      %p150 = pneg %p56
      %p151 = pneg %p53
      %p152 = pneg %p77
      %p153 = pneg %p74
      %p154 = pneg %p103
      %p155 = pneg %p100
      %p156 = scmp.lt.s32.totalorder %s14, 1
      %s157 = scalar_select %p156, %s14, 1
      %s158 = smul.addr %s157, 8
      %s159 = smul.addr %s158, 8
      %s160 = scalar_lea.vmem %s3, %s159
      %p161 = scmp.lt.s32.totalorder %s14, 1
      %s162 = scalar_select %p161, %s14, 1
      %s163 = smul.addr %s162, 8
      %s164 = smul.addr %s163, 8
      %s165 = scalar_lea.vmem %s0, %s164
      %p166 = scmp.lt.s32.totalorder %s14, 1
      %s167 = scalar_select %p166, %s14, 1
      %s168 = smul.addr %s167, 8
      %s169 = smul.addr %s168, 8
      %s170 = scalar_lea.vmem %s3, %s169
      %v171 = vld [vmem:[%s165] sm:$0xff]
      %v172 = vld [vmem:[%s165 + $0x8] sm:$0xff]
      %v173 = vld [vmem:[%s165 + $0x10] sm:$0xff]
      %v174 = vld [vmem:[%s165 + $0x18] sm:$0xff]
      %v175 = vld [vmem:[%s165 + $0x20] sm:$0xff]
      %v176 = vld [vmem:[%s165 + $0x28] sm:$0xff]
      %v177 = vld [vmem:[%s165 + $0x30] sm:$0xff]
      %v178 = vld [vmem:[%s165 + $0x38] sm:$0xff]
      %v179 = vld [vmem:[%s1] sm:$0xff]
      %v180 = vld [vmem:[%s1 + $0x8] sm:$0xff]
      %v181 = vld [vmem:[%s1 + $0x10] sm:$0xff]
      %v182 = vld [vmem:[%s1 + $0x18] sm:$0xff]
      %v183 = vld [vmem:[%s1 + $0x20] sm:$0x1]
      %v184 = vld [vmem:[%s1 + $0x28] sm:$0x1]
      %v185 = vld [vmem:[%s1 + $0x30] sm:$0x1]
      %v186 = vld [vmem:[%s1 + $0x38] sm:$0x1]
      %187 = vrot.lane.b32.xlu0 %v171, 32
      %v188 = vpop.permute.xlu0 %187
      %189 = vrot.lane.b32.xlu0 %v175, 32
      %v190 = vpop.permute.xlu0 %189
      %191 = vrot.lane.b32.xlu0 %v172, 32
      %v192 = vpop.permute.xlu0 %191
      %193 = vrot.lane.b32.xlu0 %v176, 32
      %v194 = vpop.permute.xlu0 %193
      %195 = vrot.lane.b32.xlu0 %v173, 32
      %v196 = vpop.permute.xlu0 %195
      %197 = vrot.lane.b32.xlu0 %v177, 32
      %v198 = vpop.permute.xlu0 %197
      %199 = vrot.lane.b32.xlu0 %v174, 32
      %v200 = vpop.permute.xlu0 %199
      %201 = vrot.lane.b32.xlu0 %v178, 32
      %v202 = vpop.permute.xlu0 %201
      %v203 = vlaneseq
      %v204 = vand.u32 %v203, 127
      %vm205 = vcmp.lt.s32.totalorder %v204, 32
      %v206 = vsel %vm205, %v196, %v200
      %v207 = vsel %vm205, %v198, %v202
      %v208 = vsel %vm205, %v192, %v196
      %v209 = vsel %vm205, %v194, %v198
      %v210 = vsel %vm205, %v188, %v192
      %v211 = vsel %vm205, %v190, %v194
      %v212 = vsel %vm205, %v200, %v188
      %v213 = vsel %vm205, %v202, %v190
      %214 = vrot.lane.b32.xlu0 %v171, 96
      %v215 = vpop.permute.xlu0 %214
      %216 = vrot.lane.b32.xlu0 %v175, 96
      %v217 = vpop.permute.xlu0 %216
      %218 = vrot.lane.b32.xlu0 %v172, 96
      %v219 = vpop.permute.xlu0 %218
      %220 = vrot.lane.b32.xlu0 %v176, 96
      %v221 = vpop.permute.xlu0 %220
      %222 = vrot.lane.b32.xlu0 %v173, 96
      %v223 = vpop.permute.xlu0 %222
      %224 = vrot.lane.b32.xlu0 %v177, 96
      %v225 = vpop.permute.xlu0 %224
      %226 = vrot.lane.b32.xlu0 %v174, 96
      %v227 = vpop.permute.xlu0 %226
      %228 = vrot.lane.b32.xlu0 %v178, 96
      %v229 = vpop.permute.xlu0 %228
      %vm230 = vcmp.lt.s32.totalorder %v204, 96
      %v231 = vsel %vm230, %v223, %v227
      %v232 = vsel %vm230, %v225, %v229
      %v233 = vsel %vm230, %v219, %v223
      %v234 = vsel %vm230, %v221, %v225
      %v235 = vsel %vm230, %v215, %v219
      %v236 = vsel %vm230, %v217, %v221
      %v237 = vsel %vm230, %v227, %v215
      %v238 = vsel %vm230, %v229, %v217
      %v239 = vlaneseq
      %v240 = vshrl.u32 %v239, 7
      %v241 = vadd.s32 %v240, 8
      %v242 = vlaneseq
      %v243 = vshrl.u32 %v242, 7
      %v244 = vsub.s32 0, %v243
      %v245 = vrot.slane %v179, %v244
      %v246 = vlaneseq
      %v247 = vshrl.u32 %v246, 7
      %v248 = vsub.s32 0, %v247
      %v249 = vrot.slane %v180, %v248
      %v250 = vlaneseq
      %v251 = vshrl.u32 %v250, 7
      %v252 = vsub.s32 0, %v251
      %v253 = vrot.slane %v181, %v252
      %v254 = vlaneseq
      %v255 = vshrl.u32 %v254, 7
      %v256 = vsub.s32 0, %v255
      %v257 = vrot.slane %v182, %v256
      %v258 = vmul.f32 %v212, %v245
      %v259 = vmul.f32 %v210, %v249
      %v260 = vmul.f32 %v208, %v253
      %v261 = vmul.f32 %v206, %v257
      %v262 = vmul.f32 %v213, %v245
      %v263 = vmul.f32 %v211, %v249
      %v264 = vmul.f32 %v209, %v253
      %v265 = vmul.f32 %v207, %v257
      %v266 = vadd.f32 %v258, 0.0
      %v267 = vadd.f32 %v259, 0.0
      %v268 = vadd.f32 %v260, 0.0
      %v269 = vadd.f32 %v261, 0.0
      %v270 = vadd.f32 %v262, 0.0
      %v271 = vadd.f32 %v263, 0.0
      %v272 = vadd.f32 %v264, 0.0
      %v273 = vadd.f32 %v265, 0.0
      %v274 = vlaneseq
      %v275 = vshrl.u32 %v274, 7
      %v276 = vsub.s32 1, %v275
      %v277 = vrot.slane %v179, %v276
      %v278 = vlaneseq
      %v279 = vshrl.u32 %v278, 7
      %v280 = vsub.s32 1, %v279
      %v281 = vrot.slane %v180, %v280
      %v282 = vlaneseq
      %v283 = vshrl.u32 %v282, 7
      %v284 = vsub.s32 1, %v283
      %v285 = vrot.slane %v181, %v284
      %v286 = vlaneseq
      %v287 = vshrl.u32 %v286, 7
      %v288 = vsub.s32 1, %v287
      %v289 = vrot.slane %v182, %v288
      %v290 = vmul.f32 %v171, %v277
      %v291 = vmul.f32 %v172, %v281
      %v292 = vmul.f32 %v173, %v285
      %v293 = vmul.f32 %v174, %v289
      %v294 = vmul.f32 %v175, %v277
      %v295 = vmul.f32 %v176, %v281
      %v296 = vmul.f32 %v177, %v285
      %v297 = vmul.f32 %v178, %v289
      %v298 = vadd.f32 %v266, %v290
      %v299 = vadd.f32 %v267, %v291
      %v300 = vadd.f32 %v268, %v292
      %v301 = vadd.f32 %v269, %v293
      %v302 = vadd.f32 %v270, %v294
      %v303 = vadd.f32 %v271, %v295
      %v304 = vadd.f32 %v272, %v296
      %v305 = vadd.f32 %v273, %v297
      %v306 = vlaneseq
      %v307 = vshrl.u32 %v306, 7
      %v308 = vsub.s32 2, %v307
      %v309 = vrot.slane %v179, %v308
      %v310 = vlaneseq
      %v311 = vshrl.u32 %v310, 7
      %v312 = vsub.s32 2, %v311
      %v313 = vrot.slane %v180, %v312
      %v314 = vlaneseq
      %v315 = vshrl.u32 %v314, 7
      %v316 = vsub.s32 2, %v315
      %v317 = vrot.slane %v181, %v316
      %v318 = vlaneseq
      %v319 = vshrl.u32 %v318, 7
      %v320 = vsub.s32 2, %v319
      %v321 = vrot.slane %v182, %v320
      %v322 = vmul.f32 %v235, %v309
      %v323 = vmul.f32 %v233, %v313
      %v324 = vmul.f32 %v231, %v317
      %v325 = vmul.f32 %v237, %v321
      %v326 = vmul.f32 %v236, %v309
      %v327 = vmul.f32 %v234, %v313
      %v328 = vmul.f32 %v232, %v317
      %v329 = vmul.f32 %v238, %v321
      %v330 = vadd.f32 %v298, %v322
      %v331 = vadd.f32 %v299, %v323
      %v332 = vadd.f32 %v300, %v324
      %v333 = vadd.f32 %v301, %v325
      %v334 = vadd.f32 %v302, %v326
      %v335 = vadd.f32 %v303, %v327
      %v336 = vadd.f32 %v304, %v328
      %v337 = vadd.f32 %v305, %v329
      %v338 = vrot.slane %v330, 7
      %v339 = vrot.slane %v331, 7
      %v340 = vrot.slane %v332, 7
      %v341 = vrot.slane %v333, 7
      %v342 = vrot.slane %v334, 7
      %v343 = vrot.slane %v335, 7
      %v344 = vrot.slane %v336, 7
      %v345 = vrot.slane %v337, 7
      %vm346 = vcmp.lt.s32.totalorder %v240, 1
      %v347 = vsel %vm346, %v338, %v342
      %v348 = vsel %vm346, %v339, %v343
      %v349 = vsel %vm346, %v340, %v344
      %v350 = vsel %vm346, %v341, %v345
      %v351 = vsel %vm346, %v342, %v338
      %v352 = vsel %vm346, %v343, %v339
      %v353 = vsel %vm346, %v344, %v340
      %v354 = vsel %vm346, %v345, %v341
      %vm355 = vcmp.ge.s32.totalorder %v240, 1
      %vm356 = vcmp.ge.s32.totalorder %v241, 1
      %v357 = vsel %vm355, %v351, 0.0
      %v358 = vsel %vm355, %v352, 0.0
      %v359 = vsel %vm355, %v353, 0.0
      %v360 = vsel %vm355, %v354, 0.0
      %v361 = vsel %vm356, %v347, 0.0
      %v362 = vsel %vm356, %v348, 0.0
      %v363 = vsel %vm356, %v349, 0.0
      %v364 = vsel %vm356, %v350, 0.0
      %v365 = vadd.f32 %v357, 0.0
      %v366 = vadd.f32 %v358, 0.0
      %v367 = vadd.f32 %v359, 0.0
      %v368 = vadd.f32 %v360, 0.0
      %v369 = vadd.f32 %v361, 0.0
      %v370 = vadd.f32 %v362, 0.0
      %v371 = vadd.f32 %v363, 0.0
      %v372 = vadd.f32 %v364, 0.0
      %v373 = vlaneseq
      %v374 = vshrl.u32 %v373, 7
      %v375 = vsub.s32 3, %v374
      %v376 = vrot.slane %v179, %v375
      %v377 = vlaneseq
      %v378 = vshrl.u32 %v377, 7
      %v379 = vsub.s32 3, %v378
      %v380 = vrot.slane %v180, %v379
      %v381 = vlaneseq
      %v382 = vshrl.u32 %v381, 7
      %v383 = vsub.s32 3, %v382
      %v384 = vrot.slane %v181, %v383
      %v385 = vlaneseq
      %v386 = vshrl.u32 %v385, 7
      %v387 = vsub.s32 3, %v386
      %v388 = vrot.slane %v182, %v387
      %v389 = vmul.f32 %v212, %v376
      %v390 = vmul.f32 %v210, %v380
      %v391 = vmul.f32 %v208, %v384
      %v392 = vmul.f32 %v206, %v388
      %v393 = vmul.f32 %v213, %v376
      %v394 = vmul.f32 %v211, %v380
      %v395 = vmul.f32 %v209, %v384
      %v396 = vmul.f32 %v207, %v388
      %v397 = vadd.f32 %v389, 0.0
      %v398 = vadd.f32 %v390, 0.0
      %v399 = vadd.f32 %v391, 0.0
      %v400 = vadd.f32 %v392, 0.0
      %v401 = vadd.f32 %v393, 0.0
      %v402 = vadd.f32 %v394, 0.0
      %v403 = vadd.f32 %v395, 0.0
      %v404 = vadd.f32 %v396, 0.0
      %v405 = vlaneseq
      %v406 = vshrl.u32 %v405, 7
      %v407 = vsub.s32 4, %v406
      %v408 = vrot.slane %v179, %v407
      %v409 = vlaneseq
      %v410 = vshrl.u32 %v409, 7
      %v411 = vsub.s32 4, %v410
      %v412 = vrot.slane %v180, %v411
      %v413 = vlaneseq
      %v414 = vshrl.u32 %v413, 7
      %v415 = vsub.s32 4, %v414
      %v416 = vrot.slane %v181, %v415
      %v417 = vlaneseq
      %v418 = vshrl.u32 %v417, 7
      %v419 = vsub.s32 4, %v418
      %v420 = vrot.slane %v182, %v419
      %v421 = vmul.f32 %v171, %v408
      %v422 = vmul.f32 %v172, %v412
      %v423 = vmul.f32 %v173, %v416
      %v424 = vmul.f32 %v174, %v420
      %v425 = vmul.f32 %v175, %v408
      %v426 = vmul.f32 %v176, %v412
      %v427 = vmul.f32 %v177, %v416
      %v428 = vmul.f32 %v178, %v420
      %v429 = vadd.f32 %v397, %v421
      %v430 = vadd.f32 %v398, %v422
      %v431 = vadd.f32 %v399, %v423
      %v432 = vadd.f32 %v400, %v424
      %v433 = vadd.f32 %v401, %v425
      %v434 = vadd.f32 %v402, %v426
      %v435 = vadd.f32 %v403, %v427
      %v436 = vadd.f32 %v404, %v428
      %v437 = vlaneseq
      %v438 = vshrl.u32 %v437, 7
      %v439 = vsub.s32 5, %v438
      %v440 = vrot.slane %v179, %v439
      %v441 = vlaneseq
      %v442 = vshrl.u32 %v441, 7
      %v443 = vsub.s32 5, %v442
      %v444 = vrot.slane %v180, %v443
      %v445 = vlaneseq
      %v446 = vshrl.u32 %v445, 7
      %v447 = vsub.s32 5, %v446
      %v448 = vrot.slane %v181, %v447
      %v449 = vlaneseq
      %v450 = vshrl.u32 %v449, 7
      %v451 = vsub.s32 5, %v450
      %v452 = vrot.slane %v182, %v451
      %v453 = vmul.f32 %v235, %v440
      %v454 = vmul.f32 %v233, %v444
      %v455 = vmul.f32 %v231, %v448
      %v456 = vmul.f32 %v237, %v452
      %v457 = vmul.f32 %v236, %v440
      %v458 = vmul.f32 %v234, %v444
      %v459 = vmul.f32 %v232, %v448
      %v460 = vmul.f32 %v238, %v452
      %v461 = vadd.f32 %v429, %v453
      %v462 = vadd.f32 %v430, %v454
      %v463 = vadd.f32 %v431, %v455
      %v464 = vadd.f32 %v432, %v456
      %v465 = vadd.f32 %v433, %v457
      %v466 = vadd.f32 %v434, %v458
      %v467 = vadd.f32 %v435, %v459
      %v468 = vadd.f32 %v436, %v460
      %v469 = vadd.f32 %v365, %v461
      %v470 = vadd.f32 %v366, %v462
      %v471 = vadd.f32 %v367, %v463
      %v472 = vadd.f32 %v368, %v464
      %v473 = vadd.f32 %v369, %v465
      %v474 = vadd.f32 %v370, %v466
      %v475 = vadd.f32 %v371, %v467
      %v476 = vadd.f32 %v372, %v468
      %v477 = vlaneseq
      %v478 = vshrl.u32 %v477, 7
      %v479 = vsub.s32 6, %v478
      %v480 = vrot.slane %v179, %v479
      %v481 = vlaneseq
      %v482 = vshrl.u32 %v481, 7
      %v483 = vsub.s32 6, %v482
      %v484 = vrot.slane %v180, %v483
      %v485 = vlaneseq
      %v486 = vshrl.u32 %v485, 7
      %v487 = vsub.s32 6, %v486
      %v488 = vrot.slane %v181, %v487
      %v489 = vlaneseq
      %v490 = vshrl.u32 %v489, 7
      %v491 = vsub.s32 6, %v490
      %v492 = vrot.slane %v182, %v491
      %v493 = vmul.f32 %v212, %v480
      %v494 = vmul.f32 %v210, %v484
      %v495 = vmul.f32 %v208, %v488
      %v496 = vmul.f32 %v206, %v492
      %v497 = vmul.f32 %v213, %v480
      %v498 = vmul.f32 %v211, %v484
      %v499 = vmul.f32 %v209, %v488
      %v500 = vmul.f32 %v207, %v492
      %v501 = vadd.f32 %v493, 0.0
      %v502 = vadd.f32 %v494, 0.0
      %v503 = vadd.f32 %v495, 0.0
      %v504 = vadd.f32 %v496, 0.0
      %v505 = vadd.f32 %v497, 0.0
      %v506 = vadd.f32 %v498, 0.0
      %v507 = vadd.f32 %v499, 0.0
      %v508 = vadd.f32 %v500, 0.0
      %v509 = vlaneseq
      %v510 = vshrl.u32 %v509, 7
      %v511 = vsub.s32 7, %v510
      %v512 = vrot.slane %v179, %v511
      %v513 = vlaneseq
      %v514 = vshrl.u32 %v513, 7
      %v515 = vsub.s32 7, %v514
      %v516 = vrot.slane %v180, %v515
      %v517 = vlaneseq
      %v518 = vshrl.u32 %v517, 7
      %v519 = vsub.s32 7, %v518
      %v520 = vrot.slane %v181, %v519
      %v521 = vlaneseq
      %v522 = vshrl.u32 %v521, 7
      %v523 = vsub.s32 7, %v522
      %v524 = vrot.slane %v182, %v523
      %v525 = vmul.f32 %v171, %v512
      %v526 = vmul.f32 %v172, %v516
      %v527 = vmul.f32 %v173, %v520
      %v528 = vmul.f32 %v174, %v524
      %v529 = vmul.f32 %v175, %v512
      %v530 = vmul.f32 %v176, %v516
      %v531 = vmul.f32 %v177, %v520
      %v532 = vmul.f32 %v178, %v524
      %v533 = vadd.f32 %v501, %v525
      %v534 = vadd.f32 %v502, %v526
      %v535 = vadd.f32 %v503, %v527
      %v536 = vadd.f32 %v504, %v528
      %v537 = vadd.f32 %v505, %v529
      %v538 = vadd.f32 %v506, %v530
      %v539 = vadd.f32 %v507, %v531
      %v540 = vadd.f32 %v508, %v532
      %v541 = vlaneseq
      %v542 = vshrl.u32 %v541, 7
      %v543 = vsub.s32 0, %v542
      %v544 = vrot.slane %v183, %v543
      %v545 = vlaneseq
      %v546 = vshrl.u32 %v545, 7
      %v547 = vsub.s32 0, %v546
      %v548 = vrot.slane %v184, %v547
      %v549 = vlaneseq
      %v550 = vshrl.u32 %v549, 7
      %v551 = vsub.s32 0, %v550
      %v552 = vrot.slane %v185, %v551
      %v553 = vlaneseq
      %v554 = vshrl.u32 %v553, 7
      %v555 = vsub.s32 0, %v554
      %v556 = vrot.slane %v186, %v555
      %v557 = vmul.f32 %v235, %v544
      %v558 = vmul.f32 %v233, %v548
      %v559 = vmul.f32 %v231, %v552
      %v560 = vmul.f32 %v237, %v556
      %v561 = vmul.f32 %v236, %v544
      %v562 = vmul.f32 %v234, %v548
      %v563 = vmul.f32 %v232, %v552
      %v564 = vmul.f32 %v238, %v556
      %v565 = vadd.f32 %v533, %v557
      %v566 = vadd.f32 %v534, %v558
      %v567 = vadd.f32 %v535, %v559
      %v568 = vadd.f32 %v536, %v560
      %v569 = vadd.f32 %v537, %v561
      %v570 = vadd.f32 %v538, %v562
      %v571 = vadd.f32 %v539, %v563
      %v572 = vadd.f32 %v540, %v564
      %v573 = vrot.slane %v565, 1
      %v574 = vrot.slane %v566, 1
      %v575 = vrot.slane %v567, 1
      %v576 = vrot.slane %v568, 1
      %v577 = vrot.slane %v569, 1
      %v578 = vrot.slane %v570, 1
      %v579 = vrot.slane %v571, 1
      %v580 = vrot.slane %v572, 1
      %vm581 = vcmp.lt.s32.totalorder %v240, 7
      %v582 = vsel %vm581, %v573, %v577
      %v583 = vsel %vm581, %v574, %v578
      %v584 = vsel %vm581, %v575, %v579
      %v585 = vsel %vm581, %v576, %v580
      %v586 = vsel %vm581, %v577, %v573
      %v587 = vsel %vm581, %v578, %v574
      %v588 = vsel %vm581, %v579, %v575
      %v589 = vsel %vm581, %v580, %v576
      %vm590 = vcmp.le.s32.totalorder %v240, 14
      %vm591 = vcmp.le.s32.totalorder %v241, 14
      %v592 = vsel %vm590, %v582, 0.0
      %v593 = vsel %vm590, %v583, 0.0
      %v594 = vsel %vm590, %v584, 0.0
      %v595 = vsel %vm590, %v585, 0.0
      %v596 = vsel %vm591, %v586, 0.0
      %v597 = vsel %vm591, %v587, 0.0
      %v598 = vsel %vm591, %v588, 0.0
      %v599 = vsel %vm591, %v589, 0.0
      %v600 = vadd.f32 %v469, %v592
      %v601 = vadd.f32 %v470, %v593
      %v602 = vadd.f32 %v471, %v594
      %v603 = vadd.f32 %v472, %v595
      %v604 = vadd.f32 %v473, %v596
      %v605 = vadd.f32 %v474, %v597
      %v606 = vadd.f32 %v475, %v598
      %v607 = vadd.f32 %v476, %v599
      %v608 = vld [vmem:[%s2] sm:$0xf]
      %v610 = vlaneseq
      %v611 = vshrl.u32 %v610, 7
      %v612 = vsub.s32 0, %v611
      %v613 = vrot.slane %v608, %v612
      %v614 = vlaneseq
      %v615 = vshrl.u32 %v614, 7
      %v616 = vsub.s32 1, %v615
      %v617 = vrot.slane %v608, %v616
      %v618 = vlaneseq
      %v619 = vshrl.u32 %v618, 7
      %v620 = vsub.s32 2, %v619
      %v621 = vrot.slane %v608, %v620
      %v622 = vlaneseq
      %v623 = vshrl.u32 %v622, 7
      %v624 = vsub.s32 3, %v623
      %v625 = vrot.slane %v608, %v624
      %v630 = vadd.f32 %v600, %v613
      %v631 = vadd.f32 %v601, %v617
      %v632 = vadd.f32 %v602, %v621
      %v633 = vadd.f32 %v603, %v625
      %v634 = vadd.f32 %v604, %v613
      %v635 = vadd.f32 %v605, %v617
      %v636 = vadd.f32 %v606, %v621
      %v637 = vadd.f32 %v607, %v625
      %v638 = vmax.f32 %v630, 0.0
      %v639 = vmax.f32 %v631, 0.0
      %v640 = vmax.f32 %v632, 0.0
      %v641 = vmax.f32 %v633, 0.0
      %v642 = vmax.f32 %v634, 0.0
      %v643 = vmax.f32 %v635, 0.0
      %v644 = vmax.f32 %v636, 0.0
      %v645 = vmax.f32 %v637, 0.0
      %646 = vst [vmem:[%s170] sm:$0xff] %v638
      %647 = vst [vmem:[%s170 + $0x8] sm:$0xff] %v639
      %648 = vst [vmem:[%s170 + $0x10] sm:$0xff] %v640
      %649 = vst [vmem:[%s170 + $0x18] sm:$0xff] %v641
      %650 = vst [vmem:[%s170 + $0x20] sm:$0xff] %v642
      %651 = vst [vmem:[%s170 + $0x28] sm:$0xff] %v643
      %652 = vst [vmem:[%s170 + $0x30] sm:$0xff] %v644
      %653 = vst [vmem:[%s170 + $0x38] sm:$0xff] %v645
      %p654 = scmp.lt.s32.totalorder %s14, 1
      %s655 = scalar_select %p654, %s14, 1
      %s656 = smul.addr %s655, 8
      %s657 = smul.addr %s656, 8
      %s658 = scalar_lea.vmem %s3, %s657
      // Predicated region
      $region33: #{dw_bn_relu.1} parent=31 // pred_check
        %p659 = pneg %p100
      $region34: #{dw_bn_relu.1} parent=31 // pred_check_branch
        %661 = sbr.rel (%p659) target = $region36
      $region35: #{dw_bn_relu.1} parent=31 // pred_region
        _
      $region36: #{dw_bn_relu.1} parent=31 // pred_fallthru
        _
    $region32: #{dw_bn_relu.1} parent=5 // pred_fallthru
      _
    %p662 = scmp.le.s32.totalorder 2, %s9
    // Predicated region
    $region37: #{dw_bn_relu.1} parent=5 // pred_check
      %p663 = pneg %p662
    $region38: #{dw_bn_relu.1} parent=5 // pred_check_branch
      %665 = sbr.rel (%p663) target = $region40
    $region39: #{dw_bn_relu.1} parent=5 // pred_region
      %s666 = ssub.s32 %s9, 2
      // Predicated region
      $region41: #{dw_bn_relu.1} parent=39 // pred_check
        %p667 = pneg %p106
      $region42: #{dw_bn_relu.1} parent=39 // pred_check_branch
        %669 = sbr.rel (%p667) target = $region44
      $region43: #{dw_bn_relu.1} parent=39 // pred_region
        %p670 = scmp.lt.s32.totalorder %s15, 1
        %s671 = scalar_select %p670, %s15, 1
        %s672 = smul.addr %s671, 8
        %s673 = smul.addr %s672, 8
        %s674 = scalar_lea.vmem %s3, %s673
      $region44: #{dw_bn_relu.1} parent=39 // pred_fallthru
        _
    $region40: #{dw_bn_relu.1} parent=5 // pred_fallthru
      _
  $region6: #{dw_bn_relu.1} parent=0 // loop_footer
    %s13 = sadd.s32 1, %s9
  $region7: #{dw_bn_relu.1} parent=0 // loop_footer_branch
    %8 = sbr.rel target = $region3
  $region8: #{dw_bn_relu.1} parent=0 // loop_exit
    _

</llo_original>
